<compile_context>
chip_gen: v5e
topology: v5e:2x2
jax: 0.10.0
libtpu: 0.0.40
codegen_flags: <defaults>
</compile_context>

<pallas_src>
import jax
import jax.numpy as jnp
from jax.experimental import pallas as pl
from jax.experimental.pallas import tpu as pltpu

_LANES = 128
# Sublane packing per itemsize: f32 -> 8, bf16/f16 -> 16, int8/fp8 -> 32.
_SUBLANE_PACK = {4: 8, 2: 16, 1: 32}


def _quant_kernel(x_ref, o_ref):
    # clip/round in f32 (matches the PyTorch f32 path); multiply by the
    # precomputed reciprocal instead of dividing (shorter dependency chain,
    # may differ from exact division by <= 1 ulp).
    x = x_ref[...].astype(jnp.float32)
    x = jnp.clip(x, 0.0, 1.0)
    o_ref[...] = (jnp.round(x * 255.0) * jnp.float32(1.0 / 255.0)).astype(o_ref.dtype)


def _quant_jnp(x):
    # Reference / fallback: XLA fuses this into one read + one write pass.
    xf = jnp.clip(x.astype(jnp.float32), 0.0, 1.0)
    return (jnp.round(xf * 255.0) / 255.0).astype(x.dtype)


def _round_up(a, b):
    return ((a + b - 1) // b) * b


def quantization(x: jax.Array, *, target_block_bytes: int = 4 * 1024 * 1024,
                 min_pallas_bytes: int = 512 * 1024,
                 donate_input: bool = False) -> jax.Array:
    """Elementwise fake-quantize to 8-bit levels in [0, 1] (layout-agnostic)."""
    n = x.size
    if n == 0:
        return x
    dtype = x.dtype
    itemsize = jnp.dtype(dtype).itemsize

    # Fallbacks (both are a single fused XLA elementwise pass, i.e. optimal
    # HBM traffic):
    #  * tiny tensors: custom-call + grid-setup overhead dominates, and a
    #    one-step grid would run on a single v7x TensorCore anyway;
    #  * flat sizes not divisible by 128 lanes: the old pad + slice path cost
    #    ~3x the minimum HBM traffic, so let XLA's fusion handle the tensor.
    # TODO(synk): a pure-Pallas tail path (memory_space=pl.ANY + masked store
    # of the <128-element remainder) could keep large non-aligned shapes in
    # the kernel as well.
    if n * itemsize < min_pallas_bytes or (n % _LANES) != 0:
        return _quant_jnp(x)

    flat = x.reshape(-1)                        # contiguous, free reshape

    # Widest lane-dense slab that evenly divides the flat size -> fewer,
    # larger, unmasked vector stores.
    lane_w = _LANES
    for cand in (1024, 512, 256, 128):
        if n % cand == 0:
            lane_w = cand
            break
    rows = n // lane_w
    pack = _SUBLANE_PACK.get(itemsize, 8)

    # ~4 MiB blocks, rounded to the dtype's sublane packing so tiles stay
    # fully packed (no padded-sublane relayouts / masked partial stores).
    block_rows = max(pack, (target_block_bytes // (lane_w * itemsize)) // pack * pack)
    block_rows = min(block_rows, _round_up(rows, pack))

    # Guarantee >= 2 grid steps for medium inputs so the single "parallel"
    # axis can be sharded across both v7x TensorCores.
    if pl.cdiv(rows, block_rows) < 2 and rows > pack:
        block_rows = max(pack, _round_up(pl.cdiv(rows, 2), pack))

    grid = (pl.cdiv(rows, block_rows),)
    x2d = flat.reshape(rows, lane_w)

    extra = {}
    if donate_input:
        # Caller promises x is donated: reuse its HBM buffer for the output
        # (halves peak HBM footprint; bandwidth unchanged).
        extra["input_output_aliases"] = {0: 0}

    out2d = pl.pallas_call(
        _quant_kernel,
        out_shape=jax.ShapeDtypeStruct((rows, lane_w), dtype),
        grid_spec=pltpu.PrefetchScalarGridSpec(
            num_scalar_prefetch=0,
            grid=grid,
            in_specs=[pl.BlockSpec((block_rows, lane_w), lambda i: (i, 0))],
            out_specs=pl.BlockSpec((block_rows, lane_w), lambda i: (i, 0)),
        ),
        compiler_params=pltpu.CompilerParams(
            dimension_semantics=("parallel",),
            # 4 MiB blocks x (in + out) x double buffering = 16 MiB; explicit
            # limit keeps this valid on v5e (16 MiB default scoped) while
            # staying well under v7x's 64 MiB physical VMEM.
            vmem_limit_bytes=32 * 1024 * 1024,
        ),
        cost_estimate=pl.CostEstimate(
            flops=4 * n, transcendentals=0, bytes_accessed=2 * n * itemsize),
        **extra,
    )(x2d)

    return out2d.reshape(x.shape)


if __name__ == "__main__":
    key = jax.random.PRNGKey(0)
    k1, k2, k3 = jax.random.split(key, 3)

    def check(xx):
        out = quantization(xx)
        jax.block_until_ready(out)
        ref = _quant_jnp(xx)
        assert out.shape == xx.shape and out.dtype == xx.dtype
        err = float(jnp.max(jnp.abs(out.astype(jnp.float32) - ref.astype(jnp.float32))))
        assert err < 1e-6, err

    # 1) Module-spec-sized NCHW input (tiny -> fused-XLA fallback path).
    #    Range [-0.25, 1.25] exercises both clamp boundaries.
    check(jax.random.uniform(k1, (2, 4, 16, 16), jnp.float32, minval=-0.25, maxval=1.25))
    # 2) 128-aligned input large enough for the Pallas path (grid >= 2 steps).
    check(jax.random.uniform(k2, (4, 3, 128, 128), jnp.float32, minval=-0.25, maxval=1.25))
    # 3) Non-128-aligned size -> single-pass fallback (no pad/slice passes).
    check(jax.random.uniform(k3, (3, 5, 7, 11), jnp.float32, minval=-0.25, maxval=1.25))

    print("KERNEL_OK")
</pallas_src>

<mosaic_0001>
module attributes {stable_mosaic.version = 11 : i64} {
  func.func @_quant_kernel(%arg0: i32, %arg1: memref<96x1024xf32, #tpu.memory_space<vmem>>, %arg2: memref<96x1024xf32, #tpu.memory_space<vmem>>) attributes {dimension_semantics = [#tpu.dimension_semantics<parallel>], iteration_bounds = array<i64: 2>, scalar_prefetch = 0 : i64, scratch_operands = 0 : i64, tpu.core_type = #tpu.core_type<tc>, window_params = [{transform_indices = @transform_0, window_bounds = array<i64: 96, 1024>}, {transform_indices = @transform_1, window_bounds = array<i64: 96, 1024>}]} {
    %c0 = arith.constant 0 : index
    %c0_0 = arith.constant 0 : index
    %0 = vector.load %arg1[%c0, %c0_0] : memref<96x1024xf32, #tpu.memory_space<vmem>>, vector<96x1024xf32>
    %cst = arith.constant 0.000000e+00 : f32
    %cst_1 = arith.constant 1.000000e+00 : f32
    %1 = vector.broadcast %cst : f32 to vector<96x1024xf32>
    %2 = arith.maximumf %1, %0 : vector<96x1024xf32>
    %3 = vector.broadcast %cst_1 : f32 to vector<96x1024xf32>
    %4 = arith.minimumf %3, %2 : vector<96x1024xf32>
    %cst_2 = arith.constant 2.550000e+02 : f32
    %5 = vector.broadcast %cst_2 : f32 to vector<96x1024xf32>
    %6 = arith.mulf %4, %5 : vector<96x1024xf32>
    %7 = math.roundeven %6 : vector<96x1024xf32>
    %cst_3 = arith.constant 0.00392156886 : f32
    %8 = vector.broadcast %cst_3 : f32 to vector<96x1024xf32>
    %9 = arith.mulf %7, %8 : vector<96x1024xf32>
    %c0_4 = arith.constant 0 : index
    %c0_5 = arith.constant 0 : index
    %10 = vector.load %arg2[%c0_4, %c0_5] : memref<96x1024xf32, #tpu.memory_space<vmem>>, vector<96x1024xf32>
    tpu.vector_store %arg2[%c0_4, %c0_5], %9 {strides = array<i32>} : memref<96x1024xf32, #tpu.memory_space<vmem>>, vector<96x1024xf32>,
    return
  }
  func.func @transform_0(%arg0: i32) -> (i32, i32) {
    %c0_i32 = arith.constant 0 : i32
    %c0_i32_0 = arith.constant 0 : i32
    return %arg0, %c0_i32 : i32, i32
  }
  func.func @transform_1(%arg0: i32) -> (i32, i32) {
    %c0_i32 = arith.constant 0 : i32
    %c0_i32_0 = arith.constant 0 : i32
    return %arg0, %c0_i32 : i32, i32
  }
}

</mosaic_0001>

<llo_original>
// kernel: tpu_custom_call.1
$region0: #{tpu_custom_call.1}
  #allocation0 [shape = 'u32[]', space=smem, size = 0x4, offset = 0x4, fixed_abs, tag = 'smem constant byte address 0x4 - core index']
  #allocation1 [shape = 'u32[72,128]{1,0:T(1,128)}', space=vmem, size = 0x9000, scoped, tag = 'internal scratch']
  %s0 = inlined_call_operand.hbm [shape: f32[192,1024], index: 0, kind: input, shape index: {}]
  %s1 = inlined_call_operand.hbm [shape: f32[192,1024], index: 1, kind: output, shape index: {}]
  %s2 = sld [smem:[#allocation0]]
  $region41: #{tpu_custom_call.1} parent=0
    _
  %s4 = ssub.s32 1, %s2
  %s5 = scalar_select 0, %s4, %s2
  $region1: #{tpu_custom_call.1} parent=0
    #allocation2 [shape = 'u8[786432]{0}', space=vmem, size = 0xc0000, scoped, tag = 'input window, operand 0']
    #allocation3 [shape = 's32[2]{0}', space=sflag, size = 0x8, scoped, tag = 'scoped memory for tpu_custom_call.1']
    #allocation4 [shape = 's32[2]{0}', space=sflag, size = 0x8, scoped, tag = 'scoped memory for tpu_custom_call.1']
    #allocation5 [shape = 'u8[786432]{0}', space=vmem, size = 0xc0000, scoped, tag = 'output window, operand 0']
    %6 = vsyncpa [#allocation3], 0
    %s7 = scalar_lea.sflag [#allocation3], 1
    %8 = vsyncpa %s7, 0
    %9 = vsyncpa [#allocation4], 0
    %s10 = scalar_lea.sflag [#allocation4], 1
    %11 = vsyncpa %s10, 0
    loop: start=0, step=1, limit=4
    $region2: #{tpu_custom_call.1} parent=1 // loop_pre_header
      _
    $region3: #{tpu_custom_call.1} parent=1 // loop_header
      %s13 = sphi 0, %s17
      %p14 = scmp.ge.s32.totalorder %s13, 4
      %s23 = sphi 0, %s25
      %s26 = sphi 0, %s23
      %s27 = sphi 0, %s26
      %s43 = sphi 0, %s27
      %s49 = sphi 0, %s51
      %s52 = sphi 0, %s49
      %s53 = sphi 0, %s52
      %s69 = sphi 0, %s53
    $region4: #{tpu_custom_call.1} parent=1 // loop_header_branch
      %16 = sbr.rel (%p14) target = $region8
    $region5: #{tpu_custom_call.1} parent=1 // loop_body
      %s18 = ssub.s32 %s13, 1
      %s19 = ssub.s32 %s13, 2
      %s20 = sadd.s32 %s13, 1
      %s21 = ssub.s32 %s13, %s20
      %p22 = scmp.eq.s32.totalorder %s21, 0
      %s24 = sadd.s32 %s23, 1
      %s25 = scalar_select %p22, %s23, %s24
      %p28 = pneg %p22
      %p29 = scmp.eq.s32.totalorder %s13, 1
      %p30 = por %p28, %p29
      %p31 = scmp.ne.s32.totalorder %s23, %s26
      %p32 = scmp.eq.s32.totalorder %s13, 0
      %p33 = por %p31, %p32
      %p34 = scmp.ne.s32.totalorder %s23, %s26
      %p35 = scmp.eq.s32.totalorder %s18, 1
      %p36 = por %p34, %p35
      %p37 = scmp.ne.s32.totalorder %s26, %s27
      %p38 = scmp.eq.s32.totalorder %s18, 0
      %p39 = por %p37, %p38
      %p40 = scmp.ne.s32.totalorder %s26, %s27
      %p41 = scmp.eq.s32.totalorder %s19, 1
      %p42 = por %p40, %p41
      %p44 = scmp.ne.s32.totalorder %s27, %s43
      %p45 = scmp.eq.s32.totalorder %s19, 0
      %p46 = por %p44, %p45
      %s47 = ssub.s32 %s13, %s20
      %p48 = scmp.eq.s32.totalorder %s47, 0
      %s50 = sadd.s32 %s49, 1
      %s51 = scalar_select %p48, %s49, %s50
      %p54 = pneg %p48
      %p55 = scmp.eq.s32.totalorder %s13, 1
      %p56 = por %p54, %p55
      %p57 = scmp.ne.s32.totalorder %s49, %s52
      %p58 = scmp.eq.s32.totalorder %s13, 0
      %p59 = por %p57, %p58
      %p60 = scmp.ne.s32.totalorder %s49, %s52
      %p61 = scmp.eq.s32.totalorder %s18, 1
      %p62 = por %p60, %p61
      %p63 = scmp.ne.s32.totalorder %s52, %s53
      %p64 = scmp.eq.s32.totalorder %s18, 0
      %p65 = por %p63, %p64
      %p66 = scmp.ne.s32.totalorder %s52, %s53
      %p67 = scmp.eq.s32.totalorder %s19, 1
      %p68 = por %p66, %p67
      %p70 = scmp.ne.s32.totalorder %s53, %s69
      %p71 = scmp.eq.s32.totalorder %s19, 0
      %p72 = por %p70, %p71
      %p73 = scmp.le.s32.totalorder 1, %s13
      %p74 = scmp.lt.s32.totalorder %s13, 3
      %p75 = pnand %p73, %p74
      %p76 = pneg %p75
      // Predicated region
      $region9: #{tpu_custom_call.1} parent=5 // pred_check
        _
      $region10: #{tpu_custom_call.1} parent=5 // pred_check_branch
        %78 = sbr.rel (%p75) target = $region12
      $region11: #{tpu_custom_call.1} parent=5 // pred_region
        %s79 = ssub.s32 %s13, 1
      $region12: #{tpu_custom_call.1} parent=5 // pred_fallthru
        _
      %p80 = scmp.lt.s32.totalorder %s13, 2
      // Predicated region
      $region13: #{tpu_custom_call.1} parent=5 // pred_check
        %p81 = pneg %p80
      $region14: #{tpu_custom_call.1} parent=5 // pred_check_branch
        %83 = sbr.rel (%p81) target = $region16
      $region15: #{tpu_custom_call.1} parent=5 // pred_region
        // Predicated region
        $region17: #{tpu_custom_call.1} parent=15 // pred_check
          %p84 = pneg %p33
        $region18: #{tpu_custom_call.1} parent=15 // pred_check_branch
          %86 = sbr.rel (%p84) target = $region20
        $region19: #{tpu_custom_call.1} parent=15 // pred_region
          %s87 = sand.u32 %s23, 1
          %s88 = scalar_lea.sflag [#allocation3], %s87
          %s89 = sand.u32 %s23, 1
          %s90 = smul.addr %s89, 768
          %s91 = scalar_lea.vmem [#allocation2], %s90
          %s92 = smul.u32 12, %s13
          %94 = vsyncadd %s88, 0
          %s95 = smul.addr %s92, 8
          %s96 = smul.addr %s95, 8
          %s97 = scalar_lea.hbm %s0, %s96
          %s98 = sshll.u32 %s97, 4
          %s99 = int_to_ptr.hbm [resolvable:$true] %s98
          %s100 = sshll.u32 %s91, 4
          %s101 = int_to_ptr.vmem [resolvable:$true] %s100
          %106 = dma.hbm_to_vmem [thread:$0]  %s99, 12288, %s101, %s88, 1024, 1024, 64
        $region20: #{tpu_custom_call.1} parent=15 // pred_fallthru
          _
      $region16: #{tpu_custom_call.1} parent=5 // pred_fallthru
        _
      %p107 = scmp.le.s32.totalorder 1, %s13
      %p108 = scmp.lt.s32.totalorder %s13, 3
      %p109 = pnand %p107, %p108
      %p110 = pneg %p109
      // Predicated region
      $region21: #{tpu_custom_call.1} parent=5 // pred_check
        _
      $region22: #{tpu_custom_call.1} parent=5 // pred_check_branch
        %112 = sbr.rel (%p109) target = $region24
      $region23: #{tpu_custom_call.1} parent=5 // pred_region
        %s113 = ssub.s32 %s13, 1
        %s114 = sand.u32 %s26, 1
        %s115 = scalar_lea.sflag [#allocation3], %s114
        %s116 = sand.u32 %s26, 1
        %s117 = smul.addr %s116, 768
        %s118 = scalar_lea.vmem [#allocation2], %s117
        // Predicated region
        $region25: #{tpu_custom_call.1} parent=23 // pred_check
          %p119 = pneg %p39
        $region26: #{tpu_custom_call.1} parent=23 // pred_check_branch
          %121 = sbr.rel (%p119) target = $region28
        $region27: #{tpu_custom_call.1} parent=23 // pred_region
          %123 = dma.done %s115, 12288
        $region28: #{tpu_custom_call.1} parent=23 // pred_fallthru
          _
        %s124 = sand.u32 %s26, 1
        %s125 = scalar_lea.sflag [#allocation3], %s124
        %s126 = sand.u32 %s26, 1
        %s127 = smul.addr %s126, 768
        %s128 = scalar_lea.vmem [#allocation2], %s127
        %p129 = pneg %p39
        %p130 = pneg %p36
        %p131 = pneg %p65
        %p132 = pneg %p62
        %s133 = sand.u32 %s52, 1
        %s134 = scalar_lea.sflag [#allocation4], %s133
        %s135 = sand.u32 %s52, 1
        %s136 = smul.addr %s135, 768
        %s137 = scalar_lea.vmem [#allocation5], %s136
        %s138 = smul.u32 12, %s18
        %s139 = smul.u32 12, %s18
        %v140 = vld [vmem:[%s118] sm:$0xff]
        %v141 = vld [vmem:[%s118 + $0x8] sm:$0xff]
        %v142 = vld [vmem:[%s118 + $0x10] sm:$0xff]
        %v143 = vld [vmem:[%s118 + $0x18] sm:$0xff]
        %v144 = vld [vmem:[%s118 + $0x20] sm:$0xff]
        %v145 = vld [vmem:[%s118 + $0x28] sm:$0xff]
        %v146 = vld [vmem:[%s118 + $0x30] sm:$0xff]
        %v147 = vld [vmem:[%s118 + $0x38] sm:$0xff]
        %v148 = vld [vmem:[%s118 + $0x40] sm:$0xff]
        %v149 = vld [vmem:[%s118 + $0x48] sm:$0xff]
        %v150 = vld [vmem:[%s118 + $0x50] sm:$0xff]
        %v151 = vld [vmem:[%s118 + $0x58] sm:$0xff]
        %v152 = vld [vmem:[%s118 + $0x60] sm:$0xff]
        %v153 = vld [vmem:[%s118 + $0x68] sm:$0xff]
        %v154 = vld [vmem:[%s118 + $0x70] sm:$0xff]
        %v155 = vld [vmem:[%s118 + $0x78] sm:$0xff]
        %v156 = vld [vmem:[%s118 + $0x80] sm:$0xff]
        %v157 = vld [vmem:[%s118 + $0x88] sm:$0xff]
        %v158 = vld [vmem:[%s118 + $0x90] sm:$0xff]
        %v159 = vld [vmem:[%s118 + $0x98] sm:$0xff]
        %v160 = vld [vmem:[%s118 + $0xa0] sm:$0xff]
        %v161 = vld [vmem:[%s118 + $0xa8] sm:$0xff]
        %v162 = vld [vmem:[%s118 + $0xb0] sm:$0xff]
        %v163 = vld [vmem:[%s118 + $0xb8] sm:$0xff]
        %v164 = vld [vmem:[%s118 + $0xc0] sm:$0xff]
        %v165 = vld [vmem:[%s118 + $0xc8] sm:$0xff]
        %v166 = vld [vmem:[%s118 + $0xd0] sm:$0xff]
        %v167 = vld [vmem:[%s118 + $0xd8] sm:$0xff]
        %v168 = vld [vmem:[%s118 + $0xe0] sm:$0xff]
        %v169 = vld [vmem:[%s118 + $0xe8] sm:$0xff]
        %v170 = vld [vmem:[%s118 + $0xf0] sm:$0xff]
        %v171 = vld [vmem:[%s118 + $0xf8] sm:$0xff]
        %v172 = vld [vmem:[%s118 + $0x100] sm:$0xff]
        %v173 = vld [vmem:[%s118 + $0x108] sm:$0xff]
        %v174 = vld [vmem:[%s118 + $0x110] sm:$0xff]
        %v175 = vld [vmem:[%s118 + $0x118] sm:$0xff]
        %v176 = vld [vmem:[%s118 + $0x120] sm:$0xff]
        %v177 = vld [vmem:[%s118 + $0x128] sm:$0xff]
        %v178 = vld [vmem:[%s118 + $0x130] sm:$0xff]
        %v179 = vld [vmem:[%s118 + $0x138] sm:$0xff]
        %v180 = vld [vmem:[%s118 + $0x140] sm:$0xff]
        %v181 = vld [vmem:[%s118 + $0x148] sm:$0xff]
        %v182 = vld [vmem:[%s118 + $0x150] sm:$0xff]
        %v183 = vld [vmem:[%s118 + $0x158] sm:$0xff]
        %v184 = vld [vmem:[%s118 + $0x160] sm:$0xff]
        %v185 = vld [vmem:[%s118 + $0x168] sm:$0xff]
        %v186 = vld [vmem:[%s118 + $0x170] sm:$0xff]
        %v187 = vld [vmem:[%s118 + $0x178] sm:$0xff]
        %v188 = vld [vmem:[%s118 + $0x180] sm:$0xff]
        %v189 = vld [vmem:[%s118 + $0x188] sm:$0xff]
        %v190 = vld [vmem:[%s118 + $0x190] sm:$0xff]
        %v191 = vld [vmem:[%s118 + $0x198] sm:$0xff]
        %v192 = vld [vmem:[%s118 + $0x1a0] sm:$0xff]
        %v193 = vld [vmem:[%s118 + $0x1a8] sm:$0xff]
        %v194 = vld [vmem:[%s118 + $0x1b0] sm:$0xff]
        %v195 = vld [vmem:[%s118 + $0x1b8] sm:$0xff]
        %v196 = vld [vmem:[%s118 + $0x1c0] sm:$0xff]
        %v197 = vld [vmem:[%s118 + $0x1c8] sm:$0xff]
        %v198 = vld [vmem:[%s118 + $0x1d0] sm:$0xff]
        %v199 = vld [vmem:[%s118 + $0x1d8] sm:$0xff]
        %v200 = vld [vmem:[%s118 + $0x1e0] sm:$0xff]
        %v201 = vld [vmem:[%s118 + $0x1e8] sm:$0xff]
        %v202 = vld [vmem:[%s118 + $0x1f0] sm:$0xff]
        %v203 = vld [vmem:[%s118 + $0x1f8] sm:$0xff]
        %v204 = vld [vmem:[%s118 + $0x200] sm:$0xff]
        %v205 = vld [vmem:[%s118 + $0x208] sm:$0xff]
        %v206 = vld [vmem:[%s118 + $0x210] sm:$0xff]
        %v207 = vld [vmem:[%s118 + $0x218] sm:$0xff]
        %v208 = vld [vmem:[%s118 + $0x220] sm:$0xff]
        %v209 = vld [vmem:[%s118 + $0x228] sm:$0xff]
        %v210 = vld [vmem:[%s118 + $0x230] sm:$0xff]
        %v211 = vld [vmem:[%s118 + $0x238] sm:$0xff]
        %v212 = vld [vmem:[%s118 + $0x240] sm:$0xff]
        %v213 = vld [vmem:[%s118 + $0x248] sm:$0xff]
        %v214 = vld [vmem:[%s118 + $0x250] sm:$0xff]
        %v215 = vld [vmem:[%s118 + $0x258] sm:$0xff]
        %v216 = vld [vmem:[%s118 + $0x260] sm:$0xff]
        %v217 = vld [vmem:[%s118 + $0x268] sm:$0xff]
        %v218 = vld [vmem:[%s118 + $0x270] sm:$0xff]
        %v219 = vld [vmem:[%s118 + $0x278] sm:$0xff]
        %v220 = vld [vmem:[%s118 + $0x280] sm:$0xff]
        %v221 = vld [vmem:[%s118 + $0x288] sm:$0xff]
        %v222 = vld [vmem:[%s118 + $0x290] sm:$0xff]
        %v223 = vld [vmem:[%s118 + $0x298] sm:$0xff]
        %v224 = vld [vmem:[%s118 + $0x2a0] sm:$0xff]
        %v225 = vld [vmem:[%s118 + $0x2a8] sm:$0xff]
        %v226 = vld [vmem:[%s118 + $0x2b0] sm:$0xff]
        %v227 = vld [vmem:[%s118 + $0x2b8] sm:$0xff]
        %v228 = vld [vmem:[%s118 + $0x2c0] sm:$0xff]
        %v229 = vld [vmem:[%s118 + $0x2c8] sm:$0xff]
        %v230 = vld [vmem:[%s118 + $0x2d0] sm:$0xff]
        %v231 = vld [vmem:[%s118 + $0x2d8] sm:$0xff]
        %v232 = vld [vmem:[%s118 + $0x2e0] sm:$0xff]
        %v233 = vld [vmem:[%s118 + $0x2e8] sm:$0xff]
        %v234 = vld [vmem:[%s118 + $0x2f0] sm:$0xff]
        %v235 = vld [vmem:[%s118 + $0x2f8] sm:$0xff]
        %v236 = vmax.f32 %v140, 0.0
        %v237 = vmax.f32 %v141, 0.0
        %v238 = vmax.f32 %v142, 0.0
        %v239 = vmax.f32 %v143, 0.0
        %v240 = vmax.f32 %v144, 0.0
        %v241 = vmax.f32 %v145, 0.0
        %v242 = vmax.f32 %v146, 0.0
        %v243 = vmax.f32 %v147, 0.0
        %v244 = vmax.f32 %v148, 0.0
        %v245 = vmax.f32 %v149, 0.0
        %v246 = vmax.f32 %v150, 0.0
        %v247 = vmax.f32 %v151, 0.0
        %v248 = vmax.f32 %v152, 0.0
        %v249 = vmax.f32 %v153, 0.0
        %v250 = vmax.f32 %v154, 0.0
        %v251 = vmax.f32 %v155, 0.0
        %v252 = vmax.f32 %v156, 0.0
        %v253 = vmax.f32 %v157, 0.0
        %v254 = vmax.f32 %v158, 0.0
        %v255 = vmax.f32 %v159, 0.0
        %v256 = vmax.f32 %v160, 0.0
        %v257 = vmax.f32 %v161, 0.0
        %v258 = vmax.f32 %v162, 0.0
        %v259 = vmax.f32 %v163, 0.0
        %v260 = vmax.f32 %v164, 0.0
        %v261 = vmax.f32 %v165, 0.0
        %v262 = vmax.f32 %v166, 0.0
        %v263 = vmax.f32 %v167, 0.0
        %v264 = vmax.f32 %v168, 0.0
        %v265 = vmax.f32 %v169, 0.0
        %v266 = vmax.f32 %v170, 0.0
        %v267 = vmax.f32 %v171, 0.0
        %v268 = vmax.f32 %v172, 0.0
        %v269 = vmax.f32 %v173, 0.0
        %v270 = vmax.f32 %v174, 0.0
        %v271 = vmax.f32 %v175, 0.0
        %v272 = vmax.f32 %v176, 0.0
        %v273 = vmax.f32 %v177, 0.0
        %v274 = vmax.f32 %v178, 0.0
        %v275 = vmax.f32 %v179, 0.0
        %v276 = vmax.f32 %v180, 0.0
        %v277 = vmax.f32 %v181, 0.0
        %v278 = vmax.f32 %v182, 0.0
        %v279 = vmax.f32 %v183, 0.0
        %v280 = vmax.f32 %v184, 0.0
        %v281 = vmax.f32 %v185, 0.0
        %v282 = vmax.f32 %v186, 0.0
        %v283 = vmax.f32 %v187, 0.0
        %v284 = vmax.f32 %v188, 0.0
        %v285 = vmax.f32 %v189, 0.0
        %v286 = vmax.f32 %v190, 0.0
        %v287 = vmax.f32 %v191, 0.0
        %v288 = vmax.f32 %v192, 0.0
        %v289 = vmax.f32 %v193, 0.0
        %v290 = vmax.f32 %v194, 0.0
        %v291 = vmax.f32 %v195, 0.0
        %v292 = vmax.f32 %v196, 0.0
        %v293 = vmax.f32 %v197, 0.0
        %v294 = vmax.f32 %v198, 0.0
        %v295 = vmax.f32 %v199, 0.0
        %v296 = vmax.f32 %v200, 0.0
        %v297 = vmax.f32 %v201, 0.0
        %v298 = vmax.f32 %v202, 0.0
        %v299 = vmax.f32 %v203, 0.0
        %v300 = vmax.f32 %v204, 0.0
        %v301 = vmax.f32 %v205, 0.0
        %v302 = vmax.f32 %v206, 0.0
        %v303 = vmax.f32 %v207, 0.0
        %v304 = vmax.f32 %v208, 0.0
        %v305 = vmax.f32 %v209, 0.0
        %v306 = vmax.f32 %v210, 0.0
        %v307 = vmax.f32 %v211, 0.0
        %v308 = vmax.f32 %v212, 0.0
        %v309 = vmax.f32 %v213, 0.0
        %v310 = vmax.f32 %v214, 0.0
        %v311 = vmax.f32 %v215, 0.0
        %v312 = vmax.f32 %v216, 0.0
        %v313 = vmax.f32 %v217, 0.0
        %v314 = vmax.f32 %v218, 0.0
        %v315 = vmax.f32 %v219, 0.0
        %v316 = vmax.f32 %v220, 0.0
        %v317 = vmax.f32 %v221, 0.0
        %v318 = vmax.f32 %v222, 0.0
        %v319 = vmax.f32 %v223, 0.0
        %v320 = vmax.f32 %v224, 0.0
        %v321 = vmax.f32 %v225, 0.0
        %v322 = vmax.f32 %v226, 0.0
        %v323 = vmax.f32 %v227, 0.0
        %v324 = vmax.f32 %v228, 0.0
        %v325 = vmax.f32 %v229, 0.0
        %v326 = vmax.f32 %v230, 0.0
        %v327 = vmax.f32 %v231, 0.0
        %v328 = vmax.f32 %v232, 0.0
        %v329 = vmax.f32 %v233, 0.0
        %v330 = vmax.f32 %v234, 0.0
        %v331 = vmax.f32 %v235, 0.0
        %v332 = vmin.f32 %v236, 1.0
        %v333 = vmin.f32 %v237, 1.0
        %v334 = vmin.f32 %v238, 1.0
        %v335 = vmin.f32 %v239, 1.0
        %v336 = vmin.f32 %v240, 1.0
        %v337 = vmin.f32 %v241, 1.0
        %v338 = vmin.f32 %v242, 1.0
        %v339 = vmin.f32 %v243, 1.0
        %v340 = vmin.f32 %v244, 1.0
        %v341 = vmin.f32 %v245, 1.0
        %v342 = vmin.f32 %v246, 1.0
        %v343 = vmin.f32 %v247, 1.0
        %v344 = vmin.f32 %v248, 1.0
        %v345 = vmin.f32 %v249, 1.0
        %v346 = vmin.f32 %v250, 1.0
        %v347 = vmin.f32 %v251, 1.0
        %v348 = vmin.f32 %v252, 1.0
        %v349 = vmin.f32 %v253, 1.0
        %v350 = vmin.f32 %v254, 1.0
        %v351 = vmin.f32 %v255, 1.0
        %v352 = vmin.f32 %v256, 1.0
        %v353 = vmin.f32 %v257, 1.0
        %v354 = vmin.f32 %v258, 1.0
        %v355 = vmin.f32 %v259, 1.0
        %v356 = vmin.f32 %v260, 1.0
        %v357 = vmin.f32 %v261, 1.0
        %v358 = vmin.f32 %v262, 1.0
        %v359 = vmin.f32 %v263, 1.0
        %v360 = vmin.f32 %v264, 1.0
        %v361 = vmin.f32 %v265, 1.0
        %v362 = vmin.f32 %v266, 1.0
        %v363 = vmin.f32 %v267, 1.0
        %v364 = vmin.f32 %v268, 1.0
        %v365 = vmin.f32 %v269, 1.0
        %v366 = vmin.f32 %v270, 1.0
        %v367 = vmin.f32 %v271, 1.0
        %v368 = vmin.f32 %v272, 1.0
        %v369 = vmin.f32 %v273, 1.0
        %v370 = vmin.f32 %v274, 1.0
        %v371 = vmin.f32 %v275, 1.0
        %v372 = vmin.f32 %v276, 1.0
        %v373 = vmin.f32 %v277, 1.0
        %v374 = vmin.f32 %v278, 1.0
        %v375 = vmin.f32 %v279, 1.0
        %v376 = vmin.f32 %v280, 1.0
        %v377 = vmin.f32 %v281, 1.0
        %v378 = vmin.f32 %v282, 1.0
        %v379 = vmin.f32 %v283, 1.0
        %v380 = vmin.f32 %v284, 1.0
        %v381 = vmin.f32 %v285, 1.0
        %v382 = vmin.f32 %v286, 1.0
        %v383 = vmin.f32 %v287, 1.0
        %v384 = vmin.f32 %v288, 1.0
        %v385 = vmin.f32 %v289, 1.0
        %v386 = vmin.f32 %v290, 1.0
        %v387 = vmin.f32 %v291, 1.0
        %v388 = vmin.f32 %v292, 1.0
        %v389 = vmin.f32 %v293, 1.0
        %v390 = vmin.f32 %v294, 1.0
        %v391 = vmin.f32 %v295, 1.0
        %v392 = vmin.f32 %v296, 1.0
        %v393 = vmin.f32 %v297, 1.0
        %v394 = vmin.f32 %v298, 1.0
        %v395 = vmin.f32 %v299, 1.0
        %v396 = vmin.f32 %v300, 1.0
        %v397 = vmin.f32 %v301, 1.0
        %v398 = vmin.f32 %v302, 1.0
        %v399 = vmin.f32 %v303, 1.0
        %v400 = vmin.f32 %v304, 1.0
        %v401 = vmin.f32 %v305, 1.0
        %v402 = vmin.f32 %v306, 1.0
        %v403 = vmin.f32 %v307, 1.0
        %v404 = vmin.f32 %v308, 1.0
        %v405 = vmin.f32 %v309, 1.0
        %v406 = vmin.f32 %v310, 1.0
        %v407 = vmin.f32 %v311, 1.0
        %v408 = vmin.f32 %v312, 1.0
        %v409 = vmin.f32 %v313, 1.0
        %v410 = vmin.f32 %v314, 1.0
        %v411 = vmin.f32 %v315, 1.0
        %v412 = vmin.f32 %v316, 1.0
        %v413 = vmin.f32 %v317, 1.0
        %v414 = vmin.f32 %v318, 1.0
        %v415 = vmin.f32 %v319, 1.0
        %v416 = vmin.f32 %v320, 1.0
        %v417 = vmin.f32 %v321, 1.0
        %v418 = vmin.f32 %v322, 1.0
        %v419 = vmin.f32 %v323, 1.0
        %v420 = vmin.f32 %v324, 1.0
        %v421 = vmin.f32 %v325, 1.0
        %v422 = vmin.f32 %v326, 1.0
        %v423 = vmin.f32 %v327, 1.0
        %v424 = vmin.f32 %v328, 1.0
        %v425 = vmin.f32 %v329, 1.0
        %v426 = vmin.f32 %v330, 1.0
        %v427 = vmin.f32 %v331, 1.0
        %v428 = vmul.f32 %v332, 255.0
        %v429 = vmul.f32 %v333, 255.0
        %v430 = vmul.f32 %v334, 255.0
        %v431 = vmul.f32 %v335, 255.0
        %v432 = vmul.f32 %v336, 255.0
        %v433 = vmul.f32 %v337, 255.0
        %v434 = vmul.f32 %v338, 255.0
        %v435 = vmul.f32 %v339, 255.0
        %v436 = vmul.f32 %v340, 255.0
        %v437 = vmul.f32 %v341, 255.0
        %v438 = vmul.f32 %v342, 255.0
        %v439 = vmul.f32 %v343, 255.0
        %v440 = vmul.f32 %v344, 255.0
        %v441 = vmul.f32 %v345, 255.0
        %v442 = vmul.f32 %v346, 255.0
        %v443 = vmul.f32 %v347, 255.0
        %v444 = vmul.f32 %v348, 255.0
        %v445 = vmul.f32 %v349, 255.0
        %v446 = vmul.f32 %v350, 255.0
        %v447 = vmul.f32 %v351, 255.0
        %v448 = vmul.f32 %v352, 255.0
        %v449 = vmul.f32 %v353, 255.0
        %v450 = vmul.f32 %v354, 255.0
        %v451 = vmul.f32 %v355, 255.0
        %v452 = vmul.f32 %v356, 255.0
        %v453 = vmul.f32 %v357, 255.0
        %v454 = vmul.f32 %v358, 255.0
        %v455 = vmul.f32 %v359, 255.0
        %v456 = vmul.f32 %v360, 255.0
        %v457 = vmul.f32 %v361, 255.0
        %v458 = vmul.f32 %v362, 255.0
        %v459 = vmul.f32 %v363, 255.0
        %v460 = vmul.f32 %v364, 255.0
        %v461 = vmul.f32 %v365, 255.0
        %v462 = vmul.f32 %v366, 255.0
        %v463 = vmul.f32 %v367, 255.0
        %v464 = vmul.f32 %v368, 255.0
        %v465 = vmul.f32 %v369, 255.0
        %v466 = vmul.f32 %v370, 255.0
        %v467 = vmul.f32 %v371, 255.0
        %v468 = vmul.f32 %v372, 255.0
        %v469 = vmul.f32 %v373, 255.0
        %v470 = vmul.f32 %v374, 255.0
        %v471 = vmul.f32 %v375, 255.0
        %v472 = vmul.f32 %v376, 255.0
        %v473 = vmul.f32 %v377, 255.0
        %v474 = vmul.f32 %v378, 255.0
        %v475 = vmul.f32 %v379, 255.0
        %v476 = vmul.f32 %v380, 255.0
        %v477 = vmul.f32 %v381, 255.0
        %v478 = vmul.f32 %v382, 255.0
        %v479 = vmul.f32 %v383, 255.0
        %v480 = vmul.f32 %v384, 255.0
        %v481 = vmul.f32 %v385, 255.0
        %v482 = vmul.f32 %v386, 255.0
        %v483 = vmul.f32 %v387, 255.0
        %v484 = vmul.f32 %v388, 255.0
        %v485 = vmul.f32 %v389, 255.0
        %v486 = vmul.f32 %v390, 255.0
        %v487 = vmul.f32 %v391, 255.0
        %v488 = vmul.f32 %v392, 255.0
        %v489 = vmul.f32 %v393, 255.0
        %v490 = vmul.f32 %v394, 255.0
        %v491 = vmul.f32 %v395, 255.0
        %v492 = vmul.f32 %v396, 255.0
        %v493 = vmul.f32 %v397, 255.0
        %v494 = vmul.f32 %v398, 255.0
        %v495 = vmul.f32 %v399, 255.0
        %v496 = vmul.f32 %v400, 255.0
        %v497 = vmul.f32 %v401, 255.0
        %v498 = vmul.f32 %v402, 255.0
        %v499 = vmul.f32 %v403, 255.0
        %v500 = vmul.f32 %v404, 255.0
        %v501 = vmul.f32 %v405, 255.0
        %v502 = vmul.f32 %v406, 255.0
        %v503 = vmul.f32 %v407, 255.0
        %v504 = vmul.f32 %v408, 255.0
        %v505 = vmul.f32 %v409, 255.0
        %v506 = vmul.f32 %v410, 255.0
        %v507 = vmul.f32 %v411, 255.0
        %v508 = vmul.f32 %v412, 255.0
        %v509 = vmul.f32 %v413, 255.0
        %v510 = vmul.f32 %v414, 255.0
        %v511 = vmul.f32 %v415, 255.0
        %v512 = vmul.f32 %v416, 255.0
        %v513 = vmul.f32 %v417, 255.0
        %v514 = vmul.f32 %v418, 255.0
        %v515 = vmul.f32 %v419, 255.0
        %v516 = vmul.f32 %v420, 255.0
        %v517 = vmul.f32 %v421, 255.0
        %v518 = vmul.f32 %v422, 255.0
        %v519 = vmul.f32 %v423, 255.0
        %v520 = vmul.f32 %v424, 255.0
        %v521 = vmul.f32 %v425, 255.0
        %v522 = vmul.f32 %v426, 255.0
        %v523 = vmul.f32 %v427, 255.0
        %v524 = vround.ne.pseudo %v428
        %v525 = vround.ne.pseudo %v429
        %v526 = vround.ne.pseudo %v430
        %v527 = vround.ne.pseudo %v431
        %v528 = vround.ne.pseudo %v432
        %v529 = vround.ne.pseudo %v433
        %v530 = vround.ne.pseudo %v434
        %v531 = vround.ne.pseudo %v435
        %v532 = vround.ne.pseudo %v436
        %v533 = vround.ne.pseudo %v437
        %v534 = vround.ne.pseudo %v438
        %v535 = vround.ne.pseudo %v439
        %v536 = vround.ne.pseudo %v440
        %v537 = vround.ne.pseudo %v441
        %v538 = vround.ne.pseudo %v442
        %v539 = vround.ne.pseudo %v443
        %v540 = vround.ne.pseudo %v444
        %v541 = vround.ne.pseudo %v445
        %v542 = vround.ne.pseudo %v446
        %v543 = vround.ne.pseudo %v447
        %v544 = vround.ne.pseudo %v448
        %v545 = vround.ne.pseudo %v449
        %v546 = vround.ne.pseudo %v450
        %v547 = vround.ne.pseudo %v451
        %v548 = vround.ne.pseudo %v452
        %v549 = vround.ne.pseudo %v453
        %v550 = vround.ne.pseudo %v454
        %v551 = vround.ne.pseudo %v455
        %v552 = vround.ne.pseudo %v456
        %v553 = vround.ne.pseudo %v457
        %v554 = vround.ne.pseudo %v458
        %v555 = vround.ne.pseudo %v459
        %v556 = vround.ne.pseudo %v460
        %v557 = vround.ne.pseudo %v461
        %v558 = vround.ne.pseudo %v462
        %v559 = vround.ne.pseudo %v463
        %v560 = vround.ne.pseudo %v464
        %v561 = vround.ne.pseudo %v465
        %v562 = vround.ne.pseudo %v466
        %v563 = vround.ne.pseudo %v467
        %v564 = vround.ne.pseudo %v468
        %v565 = vround.ne.pseudo %v469
        %v566 = vround.ne.pseudo %v470
        %v567 = vround.ne.pseudo %v471
        %v568 = vround.ne.pseudo %v472
        %v569 = vround.ne.pseudo %v473
        %v570 = vround.ne.pseudo %v474
        %v571 = vround.ne.pseudo %v475
        %v572 = vround.ne.pseudo %v476
        %v573 = vround.ne.pseudo %v477
        %v574 = vround.ne.pseudo %v478
        %v575 = vround.ne.pseudo %v479
        %v576 = vround.ne.pseudo %v480
        %v577 = vround.ne.pseudo %v481
        %v578 = vround.ne.pseudo %v482
        %v579 = vround.ne.pseudo %v483
        %v580 = vround.ne.pseudo %v484
        %v581 = vround.ne.pseudo %v485
        %v582 = vround.ne.pseudo %v486
        %v583 = vround.ne.pseudo %v487
        %v584 = vround.ne.pseudo %v488
        %v585 = vround.ne.pseudo %v489
        %v586 = vround.ne.pseudo %v490
        %v587 = vround.ne.pseudo %v491
        %v588 = vround.ne.pseudo %v492
        %v589 = vround.ne.pseudo %v493
        %v590 = vround.ne.pseudo %v494
        %v591 = vround.ne.pseudo %v495
        %v592 = vround.ne.pseudo %v496
        %v593 = vround.ne.pseudo %v497
        %v594 = vround.ne.pseudo %v498
        %v595 = vround.ne.pseudo %v499
        %v596 = vround.ne.pseudo %v500
        %v597 = vround.ne.pseudo %v501
        %v598 = vround.ne.pseudo %v502
        %v599 = vround.ne.pseudo %v503
        %v600 = vround.ne.pseudo %v504
        %v601 = vround.ne.pseudo %v505
        %v602 = vround.ne.pseudo %v506
        %v603 = vround.ne.pseudo %v507
        %v604 = vround.ne.pseudo %v508
        %v605 = vround.ne.pseudo %v509
        %v606 = vround.ne.pseudo %v510
        %v607 = vround.ne.pseudo %v511
        %v608 = vround.ne.pseudo %v512
        %v609 = vround.ne.pseudo %v513
        %v610 = vround.ne.pseudo %v514
        %v611 = vround.ne.pseudo %v515
        %v612 = vround.ne.pseudo %v516
        %v613 = vround.ne.pseudo %v517
        %v614 = vround.ne.pseudo %v518
        %v615 = vround.ne.pseudo %v519
        %v616 = vround.ne.pseudo %v520
        %v617 = vround.ne.pseudo %v521
        %v618 = vround.ne.pseudo %v522
        %v619 = vround.ne.pseudo %v523
        %v620 = vmul.f32 %v524, 0.003921569
        %v621 = vmul.f32 %v525, 0.003921569
        %v622 = vmul.f32 %v526, 0.003921569
        %v623 = vmul.f32 %v527, 0.003921569
        %v624 = vmul.f32 %v528, 0.003921569
        %v625 = vmul.f32 %v529, 0.003921569
        %v626 = vmul.f32 %v530, 0.003921569
        %v627 = vmul.f32 %v531, 0.003921569
        %v628 = vmul.f32 %v532, 0.003921569
        %v629 = vmul.f32 %v533, 0.003921569
        %v630 = vmul.f32 %v534, 0.003921569
        %v631 = vmul.f32 %v535, 0.003921569
        %v632 = vmul.f32 %v536, 0.003921569
        %v633 = vmul.f32 %v537, 0.003921569
        %v634 = vmul.f32 %v538, 0.003921569
        %v635 = vmul.f32 %v539, 0.003921569
        %v636 = vmul.f32 %v540, 0.003921569
        %v637 = vmul.f32 %v541, 0.003921569
        %v638 = vmul.f32 %v542, 0.003921569
        %v639 = vmul.f32 %v543, 0.003921569
        %v640 = vmul.f32 %v544, 0.003921569
        %v641 = vmul.f32 %v545, 0.003921569
        %v642 = vmul.f32 %v546, 0.003921569
        %v643 = vmul.f32 %v547, 0.003921569
        %v644 = vmul.f32 %v548, 0.003921569
        %v645 = vmul.f32 %v549, 0.003921569
        %v646 = vmul.f32 %v550, 0.003921569
        %v647 = vmul.f32 %v551, 0.003921569
        %v648 = vmul.f32 %v552, 0.003921569
        %v649 = vmul.f32 %v553, 0.003921569
        %v650 = vmul.f32 %v554, 0.003921569
        %v651 = vmul.f32 %v555, 0.003921569
        %v652 = vmul.f32 %v556, 0.003921569
        %v653 = vmul.f32 %v557, 0.003921569
        %v654 = vmul.f32 %v558, 0.003921569
        %v655 = vmul.f32 %v559, 0.003921569
        %v656 = vmul.f32 %v560, 0.003921569
        %v657 = vmul.f32 %v561, 0.003921569
        %v658 = vmul.f32 %v562, 0.003921569
        %v659 = vmul.f32 %v563, 0.003921569
        %v660 = vmul.f32 %v564, 0.003921569
        %v661 = vmul.f32 %v565, 0.003921569
        %v662 = vmul.f32 %v566, 0.003921569
        %v663 = vmul.f32 %v567, 0.003921569
        %v664 = vmul.f32 %v568, 0.003921569
        %v665 = vmul.f32 %v569, 0.003921569
        %v666 = vmul.f32 %v570, 0.003921569
        %v667 = vmul.f32 %v571, 0.003921569
        %v668 = vmul.f32 %v572, 0.003921569
        %v669 = vmul.f32 %v573, 0.003921569
        %v670 = vmul.f32 %v574, 0.003921569
        %v671 = vmul.f32 %v575, 0.003921569
        %v672 = vmul.f32 %v576, 0.003921569
        %v673 = vmul.f32 %v577, 0.003921569
        %v674 = vmul.f32 %v578, 0.003921569
        %v675 = vmul.f32 %v579, 0.003921569
        %v676 = vmul.f32 %v580, 0.003921569
        %v677 = vmul.f32 %v581, 0.003921569
        %v678 = vmul.f32 %v582, 0.003921569
        %v679 = vmul.f32 %v583, 0.003921569
        %v680 = vmul.f32 %v584, 0.003921569
        %v681 = vmul.f32 %v585, 0.003921569
        %v682 = vmul.f32 %v586, 0.003921569
        %v683 = vmul.f32 %v587, 0.003921569
        %v684 = vmul.f32 %v588, 0.003921569
        %v685 = vmul.f32 %v589, 0.003921569
        %v686 = vmul.f32 %v590, 0.003921569
        %v687 = vmul.f32 %v591, 0.003921569
        %v688 = vmul.f32 %v592, 0.003921569
        %v689 = vmul.f32 %v593, 0.003921569
        %v690 = vmul.f32 %v594, 0.003921569
        %v691 = vmul.f32 %v595, 0.003921569
        %v692 = vmul.f32 %v596, 0.003921569
        %v693 = vmul.f32 %v597, 0.003921569
        %v694 = vmul.f32 %v598, 0.003921569
        %v695 = vmul.f32 %v599, 0.003921569
        %v696 = vmul.f32 %v600, 0.003921569
        %v697 = vmul.f32 %v601, 0.003921569
        %v698 = vmul.f32 %v602, 0.003921569
        %v699 = vmul.f32 %v603, 0.003921569
        %v700 = vmul.f32 %v604, 0.003921569
        %v701 = vmul.f32 %v605, 0.003921569
        %v702 = vmul.f32 %v606, 0.003921569
        %v703 = vmul.f32 %v607, 0.003921569
        %v704 = vmul.f32 %v608, 0.003921569
        %v705 = vmul.f32 %v609, 0.003921569
        %v706 = vmul.f32 %v610, 0.003921569
        %v707 = vmul.f32 %v611, 0.003921569
        %v708 = vmul.f32 %v612, 0.003921569
        %v709 = vmul.f32 %v613, 0.003921569
        %v710 = vmul.f32 %v614, 0.003921569
        %v711 = vmul.f32 %v615, 0.003921569
        %v712 = vmul.f32 %v616, 0.003921569
        %v713 = vmul.f32 %v617, 0.003921569
        %v714 = vmul.f32 %v618, 0.003921569
        %v715 = vmul.f32 %v619, 0.003921569
        %716 = vst [vmem:[%s137] sm:$0xff] %v620
        %717 = vst [vmem:[%s137 + $0x8] sm:$0xff] %v621
        %718 = vst [vmem:[%s137 + $0x10] sm:$0xff] %v622
        %719 = vst [vmem:[%s137 + $0x18] sm:$0xff] %v623
        %720 = vst [vmem:[%s137 + $0x20] sm:$0xff] %v624
        %721 = vst [vmem:[%s137 + $0x28] sm:$0xff] %v625
        %722 = vst [vmem:[%s137 + $0x30] sm:$0xff] %v626
        %723 = vst [vmem:[%s137 + $0x38] sm:$0xff] %v627
        %724 = vst [vmem:[%s137 + $0x40] sm:$0xff] %v628
        %725 = vst [vmem:[%s137 + $0x48] sm:$0xff] %v629
        %726 = vst [vmem:[%s137 + $0x50] sm:$0xff] %v630
        %727 = vst [vmem:[%s137 + $0x58] sm:$0xff] %v631
        %728 = vst [vmem:[%s137 + $0x60] sm:$0xff] %v632
        %729 = vst [vmem:[%s137 + $0x68] sm:$0xff] %v633
        %730 = vst [vmem:[%s137 + $0x70] sm:$0xff] %v634
        %731 = vst [vmem:[%s137 + $0x78] sm:$0xff] %v635
        %732 = vst [vmem:[%s137 + $0x80] sm:$0xff] %v636
        %733 = vst [vmem:[%s137 + $0x88] sm:$0xff] %v637
        %734 = vst [vmem:[%s137 + $0x90] sm:$0xff] %v638
        %735 = vst [vmem:[%s137 + $0x98] sm:$0xff] %v639
        %736 = vst [vmem:[%s137 + $0xa0] sm:$0xff] %v640
        %737 = vst [vmem:[%s137 + $0xa8] sm:$0xff] %v641
        %738 = vst [vmem:[%s137 + $0xb0] sm:$0xff] %v642
        %739 = vst [vmem:[%s137 + $0xb8] sm:$0xff] %v643
        %740 = vst [vmem:[%s137 + $0xc0] sm:$0xff] %v644
        %741 = vst [vmem:[%s137 + $0xc8] sm:$0xff] %v645
        %742 = vst [vmem:[%s137 + $0xd0] sm:$0xff] %v646
        %743 = vst [vmem:[%s137 + $0xd8] sm:$0xff] %v647
        %744 = vst [vmem:[%s137 + $0xe0] sm:$0xff] %v648
        %745 = vst [vmem:[%s137 + $0xe8] sm:$0xff] %v649
        %746 = vst [vmem:[%s137 + $0xf0] sm:$0xff] %v650
        %747 = vst [vmem:[%s137 + $0xf8] sm:$0xff] %v651
        %748 = vst [vmem:[%s137 + $0x100] sm:$0xff] %v652
        %749 = vst [vmem:[%s137 + $0x108] sm:$0xff] %v653
        %750 = vst [vmem:[%s137 + $0x110] sm:$0xff] %v654
        %751 = vst [vmem:[%s137 + $0x118] sm:$0xff] %v655
        %752 = vst [vmem:[%s137 + $0x120] sm:$0xff] %v656
        %753 = vst [vmem:[%s137 + $0x128] sm:$0xff] %v657
        %754 = vst [vmem:[%s137 + $0x130] sm:$0xff] %v658
        %755 = vst [vmem:[%s137 + $0x138] sm:$0xff] %v659
        %756 = vst [vmem:[%s137 + $0x140] sm:$0xff] %v660
        %757 = vst [vmem:[%s137 + $0x148] sm:$0xff] %v661
        %758 = vst [vmem:[%s137 + $0x150] sm:$0xff] %v662
        %759 = vst [vmem:[%s137 + $0x158] sm:$0xff] %v663
        %760 = vst [vmem:[%s137 + $0x160] sm:$0xff] %v664
        %761 = vst [vmem:[%s137 + $0x168] sm:$0xff] %v665
        %762 = vst [vmem:[%s137 + $0x170] sm:$0xff] %v666
        %763 = vst [vmem:[%s137 + $0x178] sm:$0xff] %v667
        %764 = vst [vmem:[%s137 + $0x180] sm:$0xff] %v668
        %765 = vst [vmem:[%s137 + $0x188] sm:$0xff] %v669
        %766 = vst [vmem:[%s137 + $0x190] sm:$0xff] %v670
        %767 = vst [vmem:[%s137 + $0x198] sm:$0xff] %v671
        %768 = vst [vmem:[%s137 + $0x1a0] sm:$0xff] %v672
        %769 = vst [vmem:[%s137 + $0x1a8] sm:$0xff] %v673
        %770 = vst [vmem:[%s137 + $0x1b0] sm:$0xff] %v674
        %771 = vst [vmem:[%s137 + $0x1b8] sm:$0xff] %v675
        %772 = vst [vmem:[%s137 + $0x1c0] sm:$0xff] %v676
        %773 = vst [vmem:[%s137 + $0x1c8] sm:$0xff] %v677
        %774 = vst [vmem:[%s137 + $0x1d0] sm:$0xff] %v678
        %775 = vst [vmem:[%s137 + $0x1d8] sm:$0xff] %v679
        %776 = vst [vmem:[%s137 + $0x1e0] sm:$0xff] %v680
        %777 = vst [vmem:[%s137 + $0x1e8] sm:$0xff] %v681
        %778 = vst [vmem:[%s137 + $0x1f0] sm:$0xff] %v682
        %779 = vst [vmem:[%s137 + $0x1f8] sm:$0xff] %v683
        %780 = vst [vmem:[%s137 + $0x200] sm:$0xff] %v684
        %781 = vst [vmem:[%s137 + $0x208] sm:$0xff] %v685
        %782 = vst [vmem:[%s137 + $0x210] sm:$0xff] %v686
        %783 = vst [vmem:[%s137 + $0x218] sm:$0xff] %v687
        %784 = vst [vmem:[%s137 + $0x220] sm:$0xff] %v688
        %785 = vst [vmem:[%s137 + $0x228] sm:$0xff] %v689
        %786 = vst [vmem:[%s137 + $0x230] sm:$0xff] %v690
        %787 = vst [vmem:[%s137 + $0x238] sm:$0xff] %v691
        %788 = vst [vmem:[%s137 + $0x240] sm:$0xff] %v692
        %789 = vst [vmem:[%s137 + $0x248] sm:$0xff] %v693
        %790 = vst [vmem:[%s137 + $0x250] sm:$0xff] %v694
        %791 = vst [vmem:[%s137 + $0x258] sm:$0xff] %v695
        %792 = vst [vmem:[%s137 + $0x260] sm:$0xff] %v696
        %793 = vst [vmem:[%s137 + $0x268] sm:$0xff] %v697
        %794 = vst [vmem:[%s137 + $0x270] sm:$0xff] %v698
        %795 = vst [vmem:[%s137 + $0x278] sm:$0xff] %v699
        %796 = vst [vmem:[%s137 + $0x280] sm:$0xff] %v700
        %797 = vst [vmem:[%s137 + $0x288] sm:$0xff] %v701
        %798 = vst [vmem:[%s137 + $0x290] sm:$0xff] %v702
        %799 = vst [vmem:[%s137 + $0x298] sm:$0xff] %v703
        %800 = vst [vmem:[%s137 + $0x2a0] sm:$0xff] %v704
        %801 = vst [vmem:[%s137 + $0x2a8] sm:$0xff] %v705
        %802 = vst [vmem:[%s137 + $0x2b0] sm:$0xff] %v706
        %803 = vst [vmem:[%s137 + $0x2b8] sm:$0xff] %v707
        %804 = vst [vmem:[%s137 + $0x2c0] sm:$0xff] %v708
        %805 = vst [vmem:[%s137 + $0x2c8] sm:$0xff] %v709
        %806 = vst [vmem:[%s137 + $0x2d0] sm:$0xff] %v710
        %807 = vst [vmem:[%s137 + $0x2d8] sm:$0xff] %v711
        %808 = vst [vmem:[%s137 + $0x2e0] sm:$0xff] %v712
        %809 = vst [vmem:[%s137 + $0x2e8] sm:$0xff] %v713
        %810 = vst [vmem:[%s137 + $0x2f0] sm:$0xff] %v714
        %811 = vst [vmem:[%s137 + $0x2f8] sm:$0xff] %v715
        %s812 = sand.u32 %s52, 1
        %s813 = scalar_lea.sflag [#allocation4], %s812
        %s814 = sand.u32 %s52, 1
        %s815 = smul.addr %s814, 768
        %s816 = scalar_lea.vmem [#allocation5], %s815
        // Predicated region
        $region29: #{tpu_custom_call.1} parent=23 // pred_check
          %p817 = pneg %p62
        $region30: #{tpu_custom_call.1} parent=23 // pred_check_branch
          %819 = sbr.rel (%p817) target = $region32
        $region31: #{tpu_custom_call.1} parent=23 // pred_region
          %s820 = smul.u32 12, %s18
          %822 = vsyncadd %s813, 0
          %s823 = smul.addr %s820, 8
          %s824 = smul.addr %s823, 8
          %s825 = scalar_lea.hbm %s1, %s824
          %s826 = sshll.u32 %s816, 4
          %s827 = int_to_ptr.vmem [resolvable:$true] %s826
          %s828 = sshll.u32 %s825, 4
          %s829 = int_to_ptr.hbm [resolvable:$true] %s828
          %834 = dma.vmem_to_hbm [thread:$0]  %s827, 12288, %s829, %s813, 1024, 1024, 64
        $region32: #{tpu_custom_call.1} parent=23 // pred_fallthru
          _
      $region24: #{tpu_custom_call.1} parent=5 // pred_fallthru
        _
      %p835 = scmp.le.s32.totalorder 2, %s13
      // Predicated region
      $region33: #{tpu_custom_call.1} parent=5 // pred_check
        %p836 = pneg %p835
      $region34: #{tpu_custom_call.1} parent=5 // pred_check_branch
        %838 = sbr.rel (%p836) target = $region36
      $region35: #{tpu_custom_call.1} parent=5 // pred_region
        %s839 = ssub.s32 %s13, 2
        // Predicated region
        $region37: #{tpu_custom_call.1} parent=35 // pred_check
          %p840 = pneg %p68
        $region38: #{tpu_custom_call.1} parent=35 // pred_check_branch
          %842 = sbr.rel (%p840) target = $region40
        $region39: #{tpu_custom_call.1} parent=35 // pred_region
          %s843 = sand.u32 %s53, 1
          %s844 = scalar_lea.sflag [#allocation4], %s843
          %s845 = sand.u32 %s53, 1
          %s846 = smul.addr %s845, 768
          %s847 = scalar_lea.vmem [#allocation5], %s846
          %849 = dma.done %s844, 12288
        $region40: #{tpu_custom_call.1} parent=35 // pred_fallthru
          _
      $region36: #{tpu_custom_call.1} parent=5 // pred_fallthru
        _
    $region6: #{tpu_custom_call.1} parent=1 // loop_footer
      %s17 = sadd.s32 1, %s13
    $region7: #{tpu_custom_call.1} parent=1 // loop_footer_branch
      %12 = sbr.rel target = $region3
    $region8: #{tpu_custom_call.1} parent=1 // loop_exit
      _
    %850 = vsyncpa [#allocation3], 1
    %s851 = scalar_lea.sflag [#allocation3], 1
    %852 = vsyncpa %s851, 1
    %853 = vsyncpa [#allocation4], 1
    %s854 = scalar_lea.sflag [#allocation4], 1
    %855 = vsyncpa %s854, 1

</llo_original>
